<compile_context>
chip_gen: v6e
topology: v6e:2x2x1
jax: 0.10.0
libtpu: 0.0.40
codegen_flags: <defaults>
</compile_context>

<pallas_src>
import functools

import jax
import jax.numpy as jnp
from jax.experimental import pallas as pl
from jax.experimental.pallas import tpu as pltpu

LANE = 128


def _round_up(x, m):
    return ((x + m - 1) // m) * m


def _mlp_fused_kernel(x_ref, *refs, num_layers, compute_dtype):
    """refs = (w1, b1, w2, b2, ..., wN, bN, o_ref).  Fused Linear(+ReLU) chain."""
    o_ref = refs[-1]
    # x arrives as f32 straight from HBM; cast to the MXU dtype here (free VPU
    # work under the DMA) instead of a separate wrapper-side HBM pass.
    h = x_ref[...].astype(compute_dtype)
    for layer in range(num_layers):
        w_ref = refs[2 * layer]
        b_ref = refs[2 * layer + 1]
        y = jnp.dot(h, w_ref[...], preferred_element_type=jnp.float32)  # MXU, f32 acc
        y = y + b_ref[...]                       # (1, D) f32 bias broadcast
        if layer < num_layers - 1:
            y = jnp.maximum(y, 0.0)              # ReLU on hidden layers only
            h = y.astype(compute_dtype)          # back to MXU dtype for next matmul
        else:
            h = y
    o_ref[...] = h.astype(o_ref.dtype)


def init_mlp_params(key, in_dim, hidden_dims, out_dim, dtype=jnp.float32):
    """Deterministic init mimicking nn.Linear's uniform(-1/sqrt(fan_in), +)."""
    params = []
    dims = [in_dim] + list(hidden_dims) + [out_dim]
    for i in range(len(dims) - 1):
        fan_in, fan_out = dims[i], dims[i + 1]
        key, kw, kb = jax.random.split(key, 3)
        bound = 1.0 / jnp.sqrt(jnp.asarray(fan_in, dtype))
        w = jax.random.uniform(kw, (fan_in, fan_out), dtype, -bound, bound)
        b = jax.random.uniform(kb, (fan_out,), dtype, -bound, bound)
        params.append((w, b))
    return params


def mlp_forward(params, x, *, tile_b=None, compute_dtype=jnp.bfloat16,
                out_dtype=jnp.float32, return_padded=False):
    """Reproduces MLP.forward: flatten if ndim>2, hidden Linear+ReLU, out Linear."""
    if x.ndim > 2:
        x = x.reshape(x.shape[0], -1)
    B, D_in = x.shape
    num_layers = len(params)
    out_dim = params[-1][0].shape[1]

    # ---- lane-dense padded layer widths: hidden 32 -> 128, out 10 -> 128 ----
    dims = [D_in] + [w.shape[1] for (w, _) in params]
    pdims = [D_in] + [_round_up(d, LANE) for d in dims[1:]]
    out_pad = pdims[-1]

    # ---- pack weights/biases (zero-padded, cast once; these are kilobytes) ----
    flat_w_b = []
    w_b_specs = []
    for layer, (w, b) in enumerate(params):
        d_i, d_o = w.shape
        pd_i, pd_o = pdims[layer], pdims[layer + 1]
        if (pd_i, pd_o) != (d_i, d_o):
            # Zero padding keeps the math exact: padded activation lanes are
            # ReLU(0 + 0) = 0 and padded weight rows multiply those zeros.
            w = jnp.pad(w, ((0, pd_i - d_i), (0, pd_o - d_o)))
            b = jnp.pad(b, ((0, pd_o - d_o),))
        flat_w_b += [w.astype(compute_dtype),
                     b.astype(jnp.float32).reshape(1, pd_o)]
        w_b_specs += [pl.BlockSpec((pd_i, pd_o), lambda i: (0, 0)),
                      pl.BlockSpec((1, pd_o), lambda i: (0, 0))]

    # ---- batch handling: pad only to a multiple of 8 sublanes ----
    B_pad = _round_up(B, 8)
    x_p = x if B_pad == B else jnp.pad(x, ((0, B_pad - B), (0, 0)))

    # ---- batch tile heuristic (generation-aware) ----
    if tile_b is None:
        if B_pad <= 512:
            # Tiny batch: a single step; splitting only adds per-step overhead.
            tile_b = B_pad
        else:
            # Large tiles (multiple of 256 for the 256-wide MXU) amortize the
            # ~0.35 us/step cost, but keep >= 2 grid steps so both v7x
            # TensorCores get work under dimension_semantics=("parallel",).
            tile_b = min(2048, _round_up(pl.cdiv(B_pad, 2), 256))
        # VMEM cap: double-buffered x/out tiles + f32 intermediates must stay
        # well under v7x's 64 MiB (v5e/v6e have 128 MiB).
        row_bytes = (2 * D_in * x_p.dtype.itemsize
                     + 2 * out_pad * jnp.dtype(out_dtype).itemsize
                     + 4 * sum(pdims[1:]))
        max_rows = max(8, (40 << 20) // row_bytes)
        if tile_b > max_rows:
            tile_b = max(8, (max_rows // 256) * 256 or (max_rows // 8) * 8)
    tile_b = max(8, _round_up(tile_b, 8))

    grid = (pl.cdiv(B_pad, tile_b),)   # ragged tail -> masked edge block

    flat_inputs = [x_p] + flat_w_b
    in_specs = [pl.BlockSpec((tile_b, D_in), lambda i: (i, 0))] + w_b_specs
    out_specs = pl.BlockSpec((tile_b, out_pad), lambda i: (i, 0))
    out_shape = jax.ShapeDtypeStruct((B_pad, out_pad), out_dtype)

    # Cost estimate (padded dims = actual work) for XLA scheduling.
    flops = sum(2 * B_pad * a * c for a, c in zip(pdims[:-1], pdims[1:]))
    weight_bytes = sum(t.size * t.dtype.itemsize for t in flat_w_b)
    bytes_accessed = (x_p.size * x_p.dtype.itemsize
                      + weight_bytes
                      + B_pad * out_pad * jnp.dtype(out_dtype).itemsize)
    cost = pl.CostEstimate(flops=flops, transcendentals=0,
                           bytes_accessed=bytes_accessed)

    # VMEM budget: double-buffered x/out tiles + resident weights + f32 temps.
    vmem_bytes = (2 * tile_b * D_in * x_p.dtype.itemsize
                  + 2 * tile_b * out_pad * jnp.dtype(out_dtype).itemsize
                  + 4 * tile_b * sum(pdims[1:])
                  + weight_bytes)
    vmem_limit = int(min(64 << 20, max(16 << 20, vmem_bytes + (4 << 20))))

    kernel = functools.partial(_mlp_fused_kernel, num_layers=num_layers,
                               compute_dtype=compute_dtype)
    out = pl.pallas_call(
        kernel,
        out_shape=out_shape,
        grid=grid,
        in_specs=in_specs,
        out_specs=out_specs,
        compiler_params=pltpu.CompilerParams(
            dimension_semantics=("parallel",),
            vmem_limit_bytes=vmem_limit,
        ),
        cost_estimate=cost,
    )(*flat_inputs)

    if return_padded:
        return out                     # (B_pad, out_pad): skip the extra slice pass
    return out[:B, :out_dim]


if __name__ == "__main__":
    key = jax.random.PRNGKey(0)
    key_x, key_p = jax.random.split(key)

    # Small shapes consistent with the module: x (B, C, H, W) flattened to in_dim.
    B, C, H, W = 2, 4, 16, 16
    in_dim = C * H * W           # 1024
    hidden_dims = [32, 32]
    out_dim = 10

    x = jax.random.normal(key_x, (B, C, H, W), dtype=jnp.float32)
    params = init_mlp_params(key_p, in_dim, hidden_dims, out_dim)

    fwd = jax.jit(mlp_forward)
    out = fwd(params, x)
    jax.block_until_ready(out)

    # Sanity check against pure-JAX f32 reference (loose tol: kernel uses bf16
    # MXU inputs with f32 accumulation).
    ref = x.reshape(B, -1)
    for w, b in params[:-1]:
        ref = jnp.maximum(ref @ w + b, 0.0)
    ref = ref @ params[-1][0] + params[-1][1]
    assert out.shape == (B, out_dim)
    assert out.dtype == jnp.float32
    assert jnp.allclose(out, ref, atol=3e-2, rtol=3e-2)

    print("KERNEL_OK")
</pallas_src>

<mosaic_0001>
module attributes {stable_mosaic.version = 11 : i64} {
  func.func @_mlp_fused_kernel(%arg0: i32, %arg1: memref<8x1024xf32, #tpu.memory_space<vmem>>, %arg2: memref<1024x128xbf16, #tpu.memory_space<vmem>>, %arg3: memref<1x128xf32, #tpu.memory_space<vmem>>, %arg4: memref<128x128xbf16, #tpu.memory_space<vmem>>, %arg5: memref<1x128xf32, #tpu.memory_space<vmem>>, %arg6: memref<128x128xbf16, #tpu.memory_space<vmem>>, %arg7: memref<1x128xf32, #tpu.memory_space<vmem>>, %arg8: memref<8x128xf32, #tpu.memory_space<vmem>>) attributes {dimension_semantics = [#tpu.dimension_semantics<parallel>], iteration_bounds = array<i64: 1>, scalar_prefetch = 0 : i64, scratch_operands = 0 : i64, tpu.core_type = #tpu.core_type<tc>, window_params = [{transform_indices = @transform_0, window_bounds = array<i64: 8, 1024>}, {pipeline_mode = #tpu.pipeline_mode<synchronous>, transform_indices = @transform_1, window_bounds = array<i64: 1024, 128>}, {pipeline_mode = #tpu.pipeline_mode<synchronous>, transform_indices = @transform_2, window_bounds = array<i64: 1, 128>}, {pipeline_mode = #tpu.pipeline_mode<synchronous>, transform_indices = @transform_3, window_bounds = array<i64: 128, 128>}, {pipeline_mode = #tpu.pipeline_mode<synchronous>, transform_indices = @transform_4, window_bounds = array<i64: 1, 128>}, {pipeline_mode = #tpu.pipeline_mode<synchronous>, transform_indices = @transform_5, window_bounds = array<i64: 128, 128>}, {pipeline_mode = #tpu.pipeline_mode<synchronous>, transform_indices = @transform_6, window_bounds = array<i64: 1, 128>}, {transform_indices = @transform_7, window_bounds = array<i64: 8, 128>}]} {
    %c0 = arith.constant 0 : index
    %c0_0 = arith.constant 0 : index
    %0 = vector.load %arg1[%c0, %c0_0] : memref<8x1024xf32, #tpu.memory_space<vmem>>, vector<8x1024xf32>
    %1 = arith.truncf %0 : vector<8x1024xf32> to vector<8x1024xbf16>
    %c0_1 = arith.constant 0 : index
    %c0_2 = arith.constant 0 : index
    %2 = vector.load %arg2[%c0_1, %c0_2] : memref<1024x128xbf16, #tpu.memory_space<vmem>>, vector<1024x128xbf16>
    %cst = arith.constant dense<0.000000e+00> : vector<8x128xf32>
    %3 = tpu.matmul %1, %2, %cst {dimension_numbers = #tpu.dot_dimension_numbers<[1], [0], [0], [1], [0, 0, 1, 1], [], []>} : vector<8x1024xbf16>, vector<1024x128xbf16>, vector<8x128xf32> -> vector<8x128xf32>
    %c0_3 = arith.constant 0 : index
    %c0_4 = arith.constant 0 : index
    %4 = vector.load %arg3[%c0_3, %c0_4] : memref<1x128xf32, #tpu.memory_space<vmem>>, vector<1x128xf32>
    %5 = vector.broadcast %4 : vector<1x128xf32> to vector<8x128xf32>
    %6 = arith.addf %3, %5 : vector<8x128xf32>
    %cst_5 = arith.constant 0.000000e+00 : f32
    %7 = vector.broadcast %cst_5 : f32 to vector<8x128xf32>
    %8 = arith.maximumf %6, %7 : vector<8x128xf32>
    %9 = arith.truncf %8 : vector<8x128xf32> to vector<8x128xbf16>
    %c0_6 = arith.constant 0 : index
    %c0_7 = arith.constant 0 : index
    %10 = vector.load %arg4[%c0_6, %c0_7] : memref<128x128xbf16, #tpu.memory_space<vmem>>, vector<128x128xbf16>
    %cst_8 = arith.constant dense<0.000000e+00> : vector<8x128xf32>
    %11 = tpu.matmul %9, %10, %cst_8 {dimension_numbers = #tpu.dot_dimension_numbers<[1], [0], [0], [1], [0, 0, 1, 1], [], []>} : vector<8x128xbf16>, vector<128x128xbf16>, vector<8x128xf32> -> vector<8x128xf32>
    %c0_9 = arith.constant 0 : index
    %c0_10 = arith.constant 0 : index
    %12 = vector.load %arg5[%c0_9, %c0_10] : memref<1x128xf32, #tpu.memory_space<vmem>>, vector<1x128xf32>
    %13 = vector.broadcast %12 : vector<1x128xf32> to vector<8x128xf32>
    %14 = arith.addf %11, %13 : vector<8x128xf32>
    %cst_11 = arith.constant 0.000000e+00 : f32
    %15 = vector.broadcast %cst_11 : f32 to vector<8x128xf32>
    %16 = arith.maximumf %14, %15 : vector<8x128xf32>
    %17 = arith.truncf %16 : vector<8x128xf32> to vector<8x128xbf16>
    %c0_12 = arith.constant 0 : index
    %c0_13 = arith.constant 0 : index
    %18 = vector.load %arg6[%c0_12, %c0_13] : memref<128x128xbf16, #tpu.memory_space<vmem>>, vector<128x128xbf16>
    %cst_14 = arith.constant dense<0.000000e+00> : vector<8x128xf32>
    %19 = tpu.matmul %17, %18, %cst_14 {dimension_numbers = #tpu.dot_dimension_numbers<[1], [0], [0], [1], [0, 0, 1, 1], [], []>} : vector<8x128xbf16>, vector<128x128xbf16>, vector<8x128xf32> -> vector<8x128xf32>
    %c0_15 = arith.constant 0 : index
    %c0_16 = arith.constant 0 : index
    %20 = vector.load %arg7[%c0_15, %c0_16] : memref<1x128xf32, #tpu.memory_space<vmem>>, vector<1x128xf32>
    %21 = vector.broadcast %20 : vector<1x128xf32> to vector<8x128xf32>
    %22 = arith.addf %19, %21 : vector<8x128xf32>
    %c0_17 = arith.constant 0 : index
    %c0_18 = arith.constant 0 : index
    %23 = vector.load %arg8[%c0_17, %c0_18] : memref<8x128xf32, #tpu.memory_space<vmem>>, vector<8x128xf32>
    tpu.vector_store %arg8[%c0_17, %c0_18], %22 {strides = array<i32>} : memref<8x128xf32, #tpu.memory_space<vmem>>, vector<8x128xf32>,
    return
  }
  func.func @transform_0(%arg0: i32) -> (i32, i32) {
    %c0_i32 = arith.constant 0 : i32
    %c0_i32_0 = arith.constant 0 : i32
    return %arg0, %c0_i32 : i32, i32
  }
  func.func @transform_1(%arg0: i32) -> (i32, i32) {
    %c0_i32 = arith.constant 0 : i32
    %c0_i32_0 = arith.constant 0 : i32
    %c0_i32_1 = arith.constant 0 : i32
    return %c0_i32, %c0_i32_0 : i32, i32
  }
  func.func @transform_2(%arg0: i32) -> (i32, i32) {
    %c0_i32 = arith.constant 0 : i32
    %c0_i32_0 = arith.constant 0 : i32
    %c0_i32_1 = arith.constant 0 : i32
    return %c0_i32, %c0_i32_0 : i32, i32
  }
  func.func @transform_3(%arg0: i32) -> (i32, i32) {
    %c0_i32 = arith.constant 0 : i32
    %c0_i32_0 = arith.constant 0 : i32
    %c0_i32_1 = arith.constant 0 : i32
    return %c0_i32, %c0_i32_0 : i32, i32
  }
  func.func @transform_4(%arg0: i32) -> (i32, i32) {
    %c0_i32 = arith.constant 0 : i32
    %c0_i32_0 = arith.constant 0 : i32
    %c0_i32_1 = arith.constant 0 : i32
    return %c0_i32, %c0_i32_0 : i32, i32
  }
  func.func @transform_5(%arg0: i32) -> (i32, i32) {
    %c0_i32 = arith.constant 0 : i32
    %c0_i32_0 = arith.constant 0 : i32
    %c0_i32_1 = arith.constant 0 : i32
    return %c0_i32, %c0_i32_0 : i32, i32
  }
  func.func @transform_6(%arg0: i32) -> (i32, i32) {
    %c0_i32 = arith.constant 0 : i32
    %c0_i32_0 = arith.constant 0 : i32
    %c0_i32_1 = arith.constant 0 : i32
    return %c0_i32, %c0_i32_0 : i32, i32
  }
  func.func @transform_7(%arg0: i32) -> (i32, i32) {
    %c0_i32 = arith.constant 0 : i32
    %c0_i32_0 = arith.constant 0 : i32
    return %arg0, %c0_i32 : i32, i32
  }
}

</mosaic_0001>

<llo_original>
// kernel: mlp_forward.1
$region0: #{mlp_forward.1}
  #allocation0 [shape = 'u32[]', space=smem, size = 0x4, offset = 0x4, fixed_abs, tag = 'smem constant byte address 0x4 - core index']
  #allocation1 [shape = 'u32[144,128]{1,0:T(1,128)}', space=vmem, size = 0x12000, scoped, tag = 'internal scratch']
  %s0 = inlined_call_operand.vmem [shape: f32[8,1024], index: 0, kind: input, shape index: {}]
  %s1 = inlined_call_operand.vmem [shape: bf16[1024,128], index: 1, kind: input, shape index: {}]
  %s2 = inlined_call_operand.vmem [shape: f32[1,128], index: 2, kind: input, shape index: {}]
  %s3 = inlined_call_operand.vmem [shape: bf16[128,128], index: 3, kind: input, shape index: {}]
  %s4 = inlined_call_operand.vmem [shape: f32[1,128], index: 4, kind: input, shape index: {}]
  %s5 = inlined_call_operand.vmem [shape: bf16[128,128], index: 5, kind: input, shape index: {}]
  %s6 = inlined_call_operand.vmem [shape: f32[1,128], index: 6, kind: input, shape index: {}]
  %s7 = inlined_call_operand.vmem [shape: f32[8,128], index: 7, kind: output, shape index: {}]
  %s8 = sld [smem:[#allocation0]]
  $region38: #{mlp_forward.1} parent=0
    _
  %s10 = ssub.s32 1, %s8
  %s11 = scalar_select 0, %s10, %s8
  // Predicated region
  $region2: #{mlp_forward.1} parent=0 // pred_check
    _
  $region3: #{mlp_forward.1} parent=0 // pred_check_branch
    %13 = sbr.rel (0) target = $region5
  $region4: #{mlp_forward.1} parent=0 // pred_region
    _
  $region5: #{mlp_forward.1} parent=0 // pred_fallthru
    _
  // Predicated region
  $region6: #{mlp_forward.1} parent=0 // pred_check
    _
  $region7: #{mlp_forward.1} parent=0 // pred_check_branch
    %15 = sbr.rel (0) target = $region9
  $region8: #{mlp_forward.1} parent=0 // pred_region
    _
  $region9: #{mlp_forward.1} parent=0 // pred_fallthru
    _
  // Predicated region
  $region10: #{mlp_forward.1} parent=0 // pred_check
    _
  $region11: #{mlp_forward.1} parent=0 // pred_check_branch
    %17 = sbr.rel (0) target = $region13
  $region12: #{mlp_forward.1} parent=0 // pred_region
    _
  $region13: #{mlp_forward.1} parent=0 // pred_fallthru
    _
  // Predicated region
  $region14: #{mlp_forward.1} parent=0 // pred_check
    _
  $region15: #{mlp_forward.1} parent=0 // pred_check_branch
    %19 = sbr.rel (0) target = $region17
  $region16: #{mlp_forward.1} parent=0 // pred_region
    _
  $region17: #{mlp_forward.1} parent=0 // pred_fallthru
    _
  // Predicated region
  $region18: #{mlp_forward.1} parent=0 // pred_check
    _
  $region19: #{mlp_forward.1} parent=0 // pred_check_branch
    %21 = sbr.rel (0) target = $region21
  $region20: #{mlp_forward.1} parent=0 // pred_region
    _
  $region21: #{mlp_forward.1} parent=0 // pred_fallthru
    _
  // Predicated region
  $region22: #{mlp_forward.1} parent=0 // pred_check
    _
  $region23: #{mlp_forward.1} parent=0 // pred_check_branch
    %23 = sbr.rel (0) target = $region25
  $region24: #{mlp_forward.1} parent=0 // pred_region
    _
  $region25: #{mlp_forward.1} parent=0 // pred_fallthru
    _
  // Predicated region
  $region26: #{mlp_forward.1} parent=0 // pred_check
    _
  $region27: #{mlp_forward.1} parent=0 // pred_check_branch
    %25 = sbr.rel (0) target = $region29
  $region28: #{mlp_forward.1} parent=0 // pred_region
    _
  $region29: #{mlp_forward.1} parent=0 // pred_fallthru
    _
  %v27 = vld [vmem:[%s0] sm:$0xff]
  %v28 = vld [vmem:[%s0 + $0x8] sm:$0xff]
  %v29 = vld [vmem:[%s0 + $0x10] sm:$0xff]
  %v30 = vld [vmem:[%s0 + $0x18] sm:$0xff]
  %v31 = vld [vmem:[%s0 + $0x20] sm:$0xff]
  %v32 = vld [vmem:[%s0 + $0x28] sm:$0xff]
  %v33 = vld [vmem:[%s0 + $0x30] sm:$0xff]
  %v34 = vld [vmem:[%s0 + $0x38] sm:$0xff]
  %v35 = vpack.c.bf16 %v27, %v27
  %v36 = vpack.c.bf16 %v28, %v28
  %v37 = vpack.c.bf16 %v29, %v29
  %v38 = vpack.c.bf16 %v30, %v30
  %v39 = vpack.c.bf16 %v31, %v31
  %v40 = vpack.c.bf16 %v32, %v32
  %v41 = vpack.c.bf16 %v33, %v33
  %v42 = vpack.c.bf16 %v34, %v34
  %v43 = vld [vmem:[%s1] sm:$0xf]
  %v44 = vld [vmem:[%s1 + $0x4] sm:$0xf]
  %v45 = vld [vmem:[%s1 + $0x8] sm:$0xf]
  %v46 = vld [vmem:[%s1 + $0xc] sm:$0xf]
  %v47 = vld [vmem:[%s1 + $0x10] sm:$0xf]
  %v48 = vld [vmem:[%s1 + $0x14] sm:$0xf]
  %v49 = vld [vmem:[%s1 + $0x18] sm:$0xf]
  %v50 = vld [vmem:[%s1 + $0x1c] sm:$0xf]
  %v51 = vld [vmem:[%s1 + $0x20] sm:$0xf]
  %v52 = vld [vmem:[%s1 + $0x24] sm:$0xf]
  %v53 = vld [vmem:[%s1 + $0x28] sm:$0xf]
  %v54 = vld [vmem:[%s1 + $0x2c] sm:$0xf]
  %v55 = vld [vmem:[%s1 + $0x30] sm:$0xf]
  %v56 = vld [vmem:[%s1 + $0x34] sm:$0xf]
  %v57 = vld [vmem:[%s1 + $0x38] sm:$0xf]
  %v58 = vld [vmem:[%s1 + $0x3c] sm:$0xf]
  %v59 = vld [vmem:[%s1 + $0x40] sm:$0xf]
  %v60 = vld [vmem:[%s1 + $0x44] sm:$0xf]
  %v61 = vld [vmem:[%s1 + $0x48] sm:$0xf]
  %v62 = vld [vmem:[%s1 + $0x4c] sm:$0xf]
  %v63 = vld [vmem:[%s1 + $0x50] sm:$0xf]
  %v64 = vld [vmem:[%s1 + $0x54] sm:$0xf]
  %v65 = vld [vmem:[%s1 + $0x58] sm:$0xf]
  %v66 = vld [vmem:[%s1 + $0x5c] sm:$0xf]
  %v67 = vld [vmem:[%s1 + $0x60] sm:$0xf]
  %v68 = vld [vmem:[%s1 + $0x64] sm:$0xf]
  %v69 = vld [vmem:[%s1 + $0x68] sm:$0xf]
  %v70 = vld [vmem:[%s1 + $0x6c] sm:$0xf]
  %v71 = vld [vmem:[%s1 + $0x70] sm:$0xf]
  %v72 = vld [vmem:[%s1 + $0x74] sm:$0xf]
  %v73 = vld [vmem:[%s1 + $0x78] sm:$0xf]
  %v74 = vld [vmem:[%s1 + $0x7c] sm:$0xf]
  %v75 = vld [vmem:[%s1 + $0x80] sm:$0xf]
  %v76 = vld [vmem:[%s1 + $0x84] sm:$0xf]
  %v77 = vld [vmem:[%s1 + $0x88] sm:$0xf]
  %v78 = vld [vmem:[%s1 + $0x8c] sm:$0xf]
  %v79 = vld [vmem:[%s1 + $0x90] sm:$0xf]
  %v80 = vld [vmem:[%s1 + $0x94] sm:$0xf]
  %v81 = vld [vmem:[%s1 + $0x98] sm:$0xf]
  %v82 = vld [vmem:[%s1 + $0x9c] sm:$0xf]
  %v83 = vld [vmem:[%s1 + $0xa0] sm:$0xf]
  %v84 = vld [vmem:[%s1 + $0xa4] sm:$0xf]
  %v85 = vld [vmem:[%s1 + $0xa8] sm:$0xf]
  %v86 = vld [vmem:[%s1 + $0xac] sm:$0xf]
  %v87 = vld [vmem:[%s1 + $0xb0] sm:$0xf]
  %v88 = vld [vmem:[%s1 + $0xb4] sm:$0xf]
  %v89 = vld [vmem:[%s1 + $0xb8] sm:$0xf]
  %v90 = vld [vmem:[%s1 + $0xbc] sm:$0xf]
  %v91 = vld [vmem:[%s1 + $0xc0] sm:$0xf]
  %v92 = vld [vmem:[%s1 + $0xc4] sm:$0xf]
  %v93 = vld [vmem:[%s1 + $0xc8] sm:$0xf]
  %v94 = vld [vmem:[%s1 + $0xcc] sm:$0xf]
  %v95 = vld [vmem:[%s1 + $0xd0] sm:$0xf]
  %v96 = vld [vmem:[%s1 + $0xd4] sm:$0xf]
  %v97 = vld [vmem:[%s1 + $0xd8] sm:$0xf]
  %v98 = vld [vmem:[%s1 + $0xdc] sm:$0xf]
  %v99 = vld [vmem:[%s1 + $0xe0] sm:$0xf]
  %v100 = vld [vmem:[%s1 + $0xe4] sm:$0xf]
  %v101 = vld [vmem:[%s1 + $0xe8] sm:$0xf]
  %v102 = vld [vmem:[%s1 + $0xec] sm:$0xf]
  %v103 = vld [vmem:[%s1 + $0xf0] sm:$0xf]
  %v104 = vld [vmem:[%s1 + $0xf4] sm:$0xf]
  %v105 = vld [vmem:[%s1 + $0xf8] sm:$0xf]
  %v106 = vld [vmem:[%s1 + $0xfc] sm:$0xf]
  %v107 = vld [vmem:[%s1 + $0x100] sm:$0xf]
  %v108 = vld [vmem:[%s1 + $0x104] sm:$0xf]
  %v109 = vld [vmem:[%s1 + $0x108] sm:$0xf]
  %v110 = vld [vmem:[%s1 + $0x10c] sm:$0xf]
  %v111 = vld [vmem:[%s1 + $0x110] sm:$0xf]
  %v112 = vld [vmem:[%s1 + $0x114] sm:$0xf]
  %v113 = vld [vmem:[%s1 + $0x118] sm:$0xf]
  %v114 = vld [vmem:[%s1 + $0x11c] sm:$0xf]
  %v115 = vld [vmem:[%s1 + $0x120] sm:$0xf]
  %v116 = vld [vmem:[%s1 + $0x124] sm:$0xf]
  %v117 = vld [vmem:[%s1 + $0x128] sm:$0xf]
  %v118 = vld [vmem:[%s1 + $0x12c] sm:$0xf]
  %v119 = vld [vmem:[%s1 + $0x130] sm:$0xf]
  %v120 = vld [vmem:[%s1 + $0x134] sm:$0xf]
  %v121 = vld [vmem:[%s1 + $0x138] sm:$0xf]
  %v122 = vld [vmem:[%s1 + $0x13c] sm:$0xf]
  %v123 = vld [vmem:[%s1 + $0x140] sm:$0xf]
  %v124 = vld [vmem:[%s1 + $0x144] sm:$0xf]
  %v125 = vld [vmem:[%s1 + $0x148] sm:$0xf]
  %v126 = vld [vmem:[%s1 + $0x14c] sm:$0xf]
  %v127 = vld [vmem:[%s1 + $0x150] sm:$0xf]
  %v128 = vld [vmem:[%s1 + $0x154] sm:$0xf]
  %v129 = vld [vmem:[%s1 + $0x158] sm:$0xf]
  %v130 = vld [vmem:[%s1 + $0x15c] sm:$0xf]
  %v131 = vld [vmem:[%s1 + $0x160] sm:$0xf]
  %v132 = vld [vmem:[%s1 + $0x164] sm:$0xf]
  %v133 = vld [vmem:[%s1 + $0x168] sm:$0xf]
  %v134 = vld [vmem:[%s1 + $0x16c] sm:$0xf]
  %v135 = vld [vmem:[%s1 + $0x170] sm:$0xf]
  %v136 = vld [vmem:[%s1 + $0x174] sm:$0xf]
  %v137 = vld [vmem:[%s1 + $0x178] sm:$0xf]
  %v138 = vld [vmem:[%s1 + $0x17c] sm:$0xf]
  %v139 = vld [vmem:[%s1 + $0x180] sm:$0xf]
  %v140 = vld [vmem:[%s1 + $0x184] sm:$0xf]
  %v141 = vld [vmem:[%s1 + $0x188] sm:$0xf]
  %v142 = vld [vmem:[%s1 + $0x18c] sm:$0xf]
  %v143 = vld [vmem:[%s1 + $0x190] sm:$0xf]
  %v144 = vld [vmem:[%s1 + $0x194] sm:$0xf]
  %v145 = vld [vmem:[%s1 + $0x198] sm:$0xf]
  %v146 = vld [vmem:[%s1 + $0x19c] sm:$0xf]
  %v147 = vld [vmem:[%s1 + $0x1a0] sm:$0xf]
  %v148 = vld [vmem:[%s1 + $0x1a4] sm:$0xf]
  %v149 = vld [vmem:[%s1 + $0x1a8] sm:$0xf]
  %v150 = vld [vmem:[%s1 + $0x1ac] sm:$0xf]
  %v151 = vld [vmem:[%s1 + $0x1b0] sm:$0xf]
  %v152 = vld [vmem:[%s1 + $0x1b4] sm:$0xf]
  %v153 = vld [vmem:[%s1 + $0x1b8] sm:$0xf]
  %v154 = vld [vmem:[%s1 + $0x1bc] sm:$0xf]
  %v155 = vld [vmem:[%s1 + $0x1c0] sm:$0xf]
  %v156 = vld [vmem:[%s1 + $0x1c4] sm:$0xf]
  %v157 = vld [vmem:[%s1 + $0x1c8] sm:$0xf]
  %v158 = vld [vmem:[%s1 + $0x1cc] sm:$0xf]
  %v159 = vld [vmem:[%s1 + $0x1d0] sm:$0xf]
  %v160 = vld [vmem:[%s1 + $0x1d4] sm:$0xf]
  %v161 = vld [vmem:[%s1 + $0x1d8] sm:$0xf]
  %v162 = vld [vmem:[%s1 + $0x1dc] sm:$0xf]
  %v163 = vld [vmem:[%s1 + $0x1e0] sm:$0xf]
  %v164 = vld [vmem:[%s1 + $0x1e4] sm:$0xf]
  %v165 = vld [vmem:[%s1 + $0x1e8] sm:$0xf]
  %v166 = vld [vmem:[%s1 + $0x1ec] sm:$0xf]
  %v167 = vld [vmem:[%s1 + $0x1f0] sm:$0xf]
  %v168 = vld [vmem:[%s1 + $0x1f4] sm:$0xf]
  %v169 = vld [vmem:[%s1 + $0x1f8] sm:$0xf]
  %v170 = vld [vmem:[%s1 + $0x1fc] sm:$0xf]
  %v171 = vld [vmem:[%s2] sm:$0x1]
  %v173 = vlaneseq
  %v174 = vshrl.u32 %v173, 7
  %v175 = vsub.s32 0, %v174
  %v176 = vrot.slane %v171, %v175
  %v306 = vunpack.c.l.b16 %v43
  %v307 = vunpack.c.l.b16 %v44
  %v308 = vunpack.c.l.b16 %v45
  %v309 = vunpack.c.l.b16 %v46
  %v310 = vunpack.c.l.b16 %v47
  %v311 = vunpack.c.l.b16 %v48
  %v312 = vunpack.c.l.b16 %v49
  %v313 = vunpack.c.l.b16 %v50
  %v314 = vunpack.c.l.b16 %v51
  %v315 = vunpack.c.l.b16 %v52
  %v316 = vunpack.c.l.b16 %v53
  %v317 = vunpack.c.l.b16 %v54
  %v318 = vunpack.c.l.b16 %v55
  %v319 = vunpack.c.l.b16 %v56
  %v320 = vunpack.c.l.b16 %v57
  %v321 = vunpack.c.l.b16 %v58
  %v322 = vunpack.c.l.b16 %v59
  %v323 = vunpack.c.l.b16 %v60
  %v324 = vunpack.c.l.b16 %v61
  %v325 = vunpack.c.l.b16 %v62
  %v326 = vunpack.c.l.b16 %v63
  %v327 = vunpack.c.l.b16 %v64
  %v328 = vunpack.c.l.b16 %v65
  %v329 = vunpack.c.l.b16 %v66
  %v330 = vunpack.c.l.b16 %v67
  %v331 = vunpack.c.l.b16 %v68
  %v332 = vunpack.c.l.b16 %v69
  %v333 = vunpack.c.l.b16 %v70
  %v334 = vunpack.c.l.b16 %v71
  %v335 = vunpack.c.l.b16 %v72
  %v336 = vunpack.c.l.b16 %v73
  %v337 = vunpack.c.l.b16 %v74
  %v338 = vunpack.c.l.b16 %v75
  %v339 = vunpack.c.l.b16 %v76
  %v340 = vunpack.c.l.b16 %v77
  %v341 = vunpack.c.l.b16 %v78
  %v342 = vunpack.c.l.b16 %v79
  %v343 = vunpack.c.l.b16 %v80
  %v344 = vunpack.c.l.b16 %v81
  %v345 = vunpack.c.l.b16 %v82
  %v346 = vunpack.c.l.b16 %v83
  %v347 = vunpack.c.l.b16 %v84
  %v348 = vunpack.c.l.b16 %v85
  %v349 = vunpack.c.l.b16 %v86
  %v350 = vunpack.c.l.b16 %v87
  %v351 = vunpack.c.l.b16 %v88
  %v352 = vunpack.c.l.b16 %v89
  %v353 = vunpack.c.l.b16 %v90
  %v354 = vunpack.c.l.b16 %v91
  %v355 = vunpack.c.l.b16 %v92
  %v356 = vunpack.c.l.b16 %v93
  %v357 = vunpack.c.l.b16 %v94
  %v358 = vunpack.c.l.b16 %v95
  %v359 = vunpack.c.l.b16 %v96
  %v360 = vunpack.c.l.b16 %v97
  %v361 = vunpack.c.l.b16 %v98
  %v362 = vunpack.c.l.b16 %v99
  %v363 = vunpack.c.l.b16 %v100
  %v364 = vunpack.c.l.b16 %v101
  %v365 = vunpack.c.l.b16 %v102
  %v366 = vunpack.c.l.b16 %v103
  %v367 = vunpack.c.l.b16 %v104
  %v368 = vunpack.c.l.b16 %v105
  %v369 = vunpack.c.l.b16 %v106
  %v370 = vunpack.c.l.b16 %v107
  %v371 = vunpack.c.l.b16 %v108
  %v372 = vunpack.c.l.b16 %v109
  %v373 = vunpack.c.l.b16 %v110
  %v374 = vunpack.c.l.b16 %v111
  %v375 = vunpack.c.l.b16 %v112
  %v376 = vunpack.c.l.b16 %v113
  %v377 = vunpack.c.l.b16 %v114
  %v378 = vunpack.c.l.b16 %v115
  %v379 = vunpack.c.l.b16 %v116
  %v380 = vunpack.c.l.b16 %v117
  %v381 = vunpack.c.l.b16 %v118
  %v382 = vunpack.c.l.b16 %v119
  %v383 = vunpack.c.l.b16 %v120
  %v384 = vunpack.c.l.b16 %v121
  %v385 = vunpack.c.l.b16 %v122
  %v386 = vunpack.c.l.b16 %v123
  %v387 = vunpack.c.l.b16 %v124
  %v388 = vunpack.c.l.b16 %v125
  %v389 = vunpack.c.l.b16 %v126
  %v390 = vunpack.c.l.b16 %v127
  %v391 = vunpack.c.l.b16 %v128
  %v392 = vunpack.c.l.b16 %v129
  %v393 = vunpack.c.l.b16 %v130
  %v394 = vunpack.c.l.b16 %v131
  %v395 = vunpack.c.l.b16 %v132
  %v396 = vunpack.c.l.b16 %v133
  %v397 = vunpack.c.l.b16 %v134
  %v398 = vunpack.c.l.b16 %v135
  %v399 = vunpack.c.l.b16 %v136
  %v400 = vunpack.c.l.b16 %v137
  %v401 = vunpack.c.l.b16 %v138
  %v402 = vunpack.c.l.b16 %v139
  %v403 = vunpack.c.l.b16 %v140
  %v404 = vunpack.c.l.b16 %v141
  %v405 = vunpack.c.l.b16 %v142
  %v406 = vunpack.c.l.b16 %v143
  %v407 = vunpack.c.l.b16 %v144
  %v408 = vunpack.c.l.b16 %v145
  %v409 = vunpack.c.l.b16 %v146
  %v410 = vunpack.c.l.b16 %v147
  %v411 = vunpack.c.l.b16 %v148
  %v412 = vunpack.c.l.b16 %v149
  %v413 = vunpack.c.l.b16 %v150
  %v414 = vunpack.c.l.b16 %v151
  %v415 = vunpack.c.l.b16 %v152
  %v416 = vunpack.c.l.b16 %v153
  %v417 = vunpack.c.l.b16 %v154
  %v418 = vunpack.c.l.b16 %v155
  %v419 = vunpack.c.l.b16 %v156
  %v420 = vunpack.c.l.b16 %v157
  %v421 = vunpack.c.l.b16 %v158
  %v422 = vunpack.c.l.b16 %v159
  %v423 = vunpack.c.l.b16 %v160
  %v424 = vunpack.c.l.b16 %v161
  %v425 = vunpack.c.l.b16 %v162
  %v426 = vunpack.c.l.b16 %v163
  %v427 = vunpack.c.l.b16 %v164
  %v428 = vunpack.c.l.b16 %v165
  %v429 = vunpack.c.l.b16 %v166
  %v430 = vunpack.c.l.b16 %v167
  %v431 = vunpack.c.l.b16 %v168
  %v432 = vunpack.c.l.b16 %v169
  %v433 = vunpack.c.l.b16 %v170
  %v434 = vpack.c.b16 %v307, %v306
  %v435 = vpack.c.b16 %v309, %v308
  %v436 = vpack.c.b16 %v311, %v310
  %v437 = vpack.c.b16 %v313, %v312
  %v438 = vpack.c.b16 %v315, %v314
  %v439 = vpack.c.b16 %v317, %v316
  %v440 = vpack.c.b16 %v319, %v318
  %v441 = vpack.c.b16 %v321, %v320
  %v442 = vpack.c.b16 %v323, %v322
  %v443 = vpack.c.b16 %v325, %v324
  %v444 = vpack.c.b16 %v327, %v326
  %v445 = vpack.c.b16 %v329, %v328
  %v446 = vpack.c.b16 %v331, %v330
  %v447 = vpack.c.b16 %v333, %v332
  %v448 = vpack.c.b16 %v335, %v334
  %v449 = vpack.c.b16 %v337, %v336
  %v450 = vpack.c.b16 %v339, %v338
  %v451 = vpack.c.b16 %v341, %v340
  %v452 = vpack.c.b16 %v343, %v342
  %v453 = vpack.c.b16 %v345, %v344
  %v454 = vpack.c.b16 %v347, %v346
  %v455 = vpack.c.b16 %v349, %v348
  %v456 = vpack.c.b16 %v351, %v350
  %v457 = vpack.c.b16 %v353, %v352
  %v458 = vpack.c.b16 %v355, %v354
  %v459 = vpack.c.b16 %v357, %v356
  %v460 = vpack.c.b16 %v359, %v358
  %v461 = vpack.c.b16 %v361, %v360
  %v462 = vpack.c.b16 %v363, %v362
  %v463 = vpack.c.b16 %v365, %v364
  %v464 = vpack.c.b16 %v367, %v366
  %v465 = vpack.c.b16 %v369, %v368
  %v466 = vpack.c.b16 %v371, %v370
  %v467 = vpack.c.b16 %v373, %v372
  %v468 = vpack.c.b16 %v375, %v374
  %v469 = vpack.c.b16 %v377, %v376
  %v470 = vpack.c.b16 %v379, %v378
  %v471 = vpack.c.b16 %v381, %v380
  %v472 = vpack.c.b16 %v383, %v382
  %v473 = vpack.c.b16 %v385, %v384
  %v474 = vpack.c.b16 %v387, %v386
  %v475 = vpack.c.b16 %v389, %v388
  %v476 = vpack.c.b16 %v391, %v390
  %v477 = vpack.c.b16 %v393, %v392
  %v478 = vpack.c.b16 %v395, %v394
  %v479 = vpack.c.b16 %v397, %v396
  %v480 = vpack.c.b16 %v399, %v398
  %v481 = vpack.c.b16 %v401, %v400
  %v482 = vpack.c.b16 %v403, %v402
  %v483 = vpack.c.b16 %v405, %v404
  %v484 = vpack.c.b16 %v407, %v406
  %v485 = vpack.c.b16 %v409, %v408
  %v486 = vpack.c.b16 %v411, %v410
  %v487 = vpack.c.b16 %v413, %v412
  %v488 = vpack.c.b16 %v415, %v414
  %v489 = vpack.c.b16 %v417, %v416
  %v490 = vpack.c.b16 %v419, %v418
  %v491 = vpack.c.b16 %v421, %v420
  %v492 = vpack.c.b16 %v423, %v422
  %v493 = vpack.c.b16 %v425, %v424
  %v494 = vpack.c.b16 %v427, %v426
  %v495 = vpack.c.b16 %v429, %v428
  %v496 = vpack.c.b16 %v431, %v430
  %v497 = vpack.c.b16 %v433, %v432
  %562 = vmatprep.subr.bf16.mxu0 0
  %563 = vmatpush1.bf16.msra.mxu0 %v441
  %564 = vmatprep.subr.bf16.mxu0 0
  %565 = vmatpush1.bf16.msra.mxu0 %v440
  %566 = vmatprep.subr.bf16.mxu0 0
  %567 = vmatpush1.bf16.msra.mxu0 %v439
  %568 = vmatprep.subr.bf16.mxu0 0
  %569 = vmatpush1.bf16.msra.mxu0 %v438
  %570 = vmatprep.subr.bf16.mxu0 0
  %571 = vmatpush1.bf16.msra.mxu0 %v437
  %572 = vmatprep.subr.bf16.mxu0 0
  %573 = vmatpush1.bf16.msra.mxu0 %v436
  %574 = vmatprep.subr.bf16.mxu0 0
  %575 = vmatpush1.bf16.msra.mxu0 %v435
  %576 = vmatprep.subr.bf16.mxu0 0
  %577 = vmatpush1.bf16.msra.mxu0 %v434
  %578 = vmatprep.subr.bf16.mxu0 0
  %579 = vmatpush2.bf16.msra.mxu0 %v449
  %580 = vmatprep.subr.bf16.mxu0 0
  %581 = vmatpush2.bf16.msra.mxu0 %v448
  %582 = vmatprep.subr.bf16.mxu0 0
  %583 = vmatpush2.bf16.msra.mxu0 %v447
  %584 = vmatprep.subr.bf16.mxu0 0
  %585 = vmatpush2.bf16.msra.mxu0 %v446
  %586 = vmatprep.subr.bf16.mxu0 0
  %587 = vmatpush2.bf16.msra.mxu0 %v445
  %588 = vmatprep.subr.bf16.mxu0 0
  %589 = vmatpush2.bf16.msra.mxu0 %v444
  %590 = vmatprep.subr.bf16.mxu0 0
  %591 = vmatpush2.bf16.msra.mxu0 %v443
  %592 = vmatprep.subr.bf16.mxu0 0
  %593 = vmatpush2.bf16.msra.mxu0 %v442
  %594 = vmatprep.mubr.bf16.mxu0 %v36
  %595 = vmatmul.mubr.bf16.gmra.mxu0 %v35
  %v596 = vpop.f32.mrf.mxu0
  %v597 = vadd.f32 %v176, %v596
  %v598 = vpop.f32.mrf.mxu0
  %v599 = vpop.f32.mrf.mxu0
  %v600 = vpop.f32.mrf.mxu0
  %601 = vdwg.mxu0
  %602 = vmatprep.subr.bf16.mxu0 0
  %603 = vmatpush1.bf16.msra.mxu0 %v457
  %604 = vmatprep.subr.bf16.mxu0 0
  %605 = vmatpush1.bf16.msra.mxu0 %v456
  %606 = vmatprep.subr.bf16.mxu0 0
  %607 = vmatpush1.bf16.msra.mxu0 %v455
  %608 = vmatprep.subr.bf16.mxu0 0
  %609 = vmatpush1.bf16.msra.mxu0 %v454
  %610 = vmatprep.subr.bf16.mxu0 0
  %611 = vmatpush1.bf16.msra.mxu0 %v453
  %612 = vmatprep.subr.bf16.mxu0 0
  %613 = vmatpush1.bf16.msra.mxu0 %v452
  %614 = vmatprep.subr.bf16.mxu0 0
  %615 = vmatpush1.bf16.msra.mxu0 %v451
  %616 = vmatprep.subr.bf16.mxu0 0
  %617 = vmatpush1.bf16.msra.mxu0 %v450
  %618 = vmatprep.subr.bf16.mxu0 0
  %619 = vmatpush2.bf16.msra.mxu0 %v465
  %620 = vmatprep.subr.bf16.mxu0 0
  %621 = vmatpush2.bf16.msra.mxu0 %v464
  %622 = vmatprep.subr.bf16.mxu0 0
  %623 = vmatpush2.bf16.msra.mxu0 %v463
  %624 = vmatprep.subr.bf16.mxu0 0
  %625 = vmatpush2.bf16.msra.mxu0 %v462
  %626 = vmatprep.subr.bf16.mxu0 0
  %627 = vmatpush2.bf16.msra.mxu0 %v461
  %628 = vmatprep.subr.bf16.mxu0 0
  %629 = vmatpush2.bf16.msra.mxu0 %v460
  %630 = vmatprep.subr.bf16.mxu0 0
  %631 = vmatpush2.bf16.msra.mxu0 %v459
  %632 = vmatprep.subr.bf16.mxu0 0
  %633 = vmatpush2.bf16.msra.mxu0 %v458
  %634 = vmatprep.mubr.bf16.mxu0 %v38
  %635 = vmatmul.mubr.bf16.gmra.mxu0 %v37
  %v636 = vpop.f32.mrf.mxu0
  %v637 = vadd.f32 %v597, %v636
  %v638 = vpop.f32.mrf.mxu0
  %v639 = vpop.f32.mrf.mxu0
  %v640 = vpop.f32.mrf.mxu0
  %641 = vdwg.mxu0
  %642 = vmatprep.subr.bf16.mxu0 0
  %643 = vmatpush1.bf16.msra.mxu0 %v473
  %644 = vmatprep.subr.bf16.mxu0 0
  %645 = vmatpush1.bf16.msra.mxu0 %v472
  %646 = vmatprep.subr.bf16.mxu0 0
  %647 = vmatpush1.bf16.msra.mxu0 %v471
  %648 = vmatprep.subr.bf16.mxu0 0
  %649 = vmatpush1.bf16.msra.mxu0 %v470
  %650 = vmatprep.subr.bf16.mxu0 0
  %651 = vmatpush1.bf16.msra.mxu0 %v469
  %652 = vmatprep.subr.bf16.mxu0 0
  %653 = vmatpush1.bf16.msra.mxu0 %v468
  %654 = vmatprep.subr.bf16.mxu0 0
  %655 = vmatpush1.bf16.msra.mxu0 %v467
  %656 = vmatprep.subr.bf16.mxu0 0
  %657 = vmatpush1.bf16.msra.mxu0 %v466
  %658 = vmatprep.subr.bf16.mxu0 0
  %659 = vmatpush2.bf16.msra.mxu0 %v481
  %660 = vmatprep.subr.bf16.mxu0 0
  %661 = vmatpush2.bf16.msra.mxu0 %v480
  %662 = vmatprep.subr.bf16.mxu0 0
  %663 = vmatpush2.bf16.msra.mxu0 %v479
  %664 = vmatprep.subr.bf16.mxu0 0
  %665 = vmatpush2.bf16.msra.mxu0 %v478
  %666 = vmatprep.subr.bf16.mxu0 0
  %667 = vmatpush2.bf16.msra.mxu0 %v477
  %668 = vmatprep.subr.bf16.mxu0 0
  %669 = vmatpush2.bf16.msra.mxu0 %v476
  %670 = vmatprep.subr.bf16.mxu0 0
  %671 = vmatpush2.bf16.msra.mxu0 %v475
  %672 = vmatprep.subr.bf16.mxu0 0
  %673 = vmatpush2.bf16.msra.mxu0 %v474
  %674 = vmatprep.mubr.bf16.mxu0 %v40
  %675 = vmatmul.mubr.bf16.gmra.mxu0 %v39
  %v676 = vpop.f32.mrf.mxu0
  %v677 = vadd.f32 %v637, %v676
  %v678 = vpop.f32.mrf.mxu0
  %v679 = vpop.f32.mrf.mxu0
  %v680 = vpop.f32.mrf.mxu0
  %681 = vdwg.mxu0
  %682 = vmatprep.subr.bf16.mxu0 0
  %683 = vmatpush1.bf16.msra.mxu0 %v489
  %684 = vmatprep.subr.bf16.mxu0 0
  %685 = vmatpush1.bf16.msra.mxu0 %v488
  %686 = vmatprep.subr.bf16.mxu0 0
  %687 = vmatpush1.bf16.msra.mxu0 %v487
  %688 = vmatprep.subr.bf16.mxu0 0
  %689 = vmatpush1.bf16.msra.mxu0 %v486
  %690 = vmatprep.subr.bf16.mxu0 0
  %691 = vmatpush1.bf16.msra.mxu0 %v485
  %692 = vmatprep.subr.bf16.mxu0 0
  %693 = vmatpush1.bf16.msra.mxu0 %v484
  %694 = vmatprep.subr.bf16.mxu0 0
  %695 = vmatpush1.bf16.msra.mxu0 %v483
  %696 = vmatprep.subr.bf16.mxu0 0
  %697 = vmatpush1.bf16.msra.mxu0 %v482
  %698 = vmatprep.subr.bf16.mxu0 0
  %699 = vmatpush2.bf16.msra.mxu0 %v497
  %700 = vmatprep.subr.bf16.mxu0 0
  %701 = vmatpush2.bf16.msra.mxu0 %v496
  %702 = vmatprep.subr.bf16.mxu0 0
  %703 = vmatpush2.bf16.msra.mxu0 %v495
  %704 = vmatprep.subr.bf16.mxu0 0
  %705 = vmatpush2.bf16.msra.mxu0 %v494
  %706 = vmatprep.subr.bf16.mxu0 0
  %707 = vmatpush2.bf16.msra.mxu0 %v493
  %708 = vmatprep.subr.bf16.mxu0 0
  %709 = vmatpush2.bf16.msra.mxu0 %v492
  %710 = vmatprep.subr.bf16.mxu0 0
  %711 = vmatpush2.bf16.msra.mxu0 %v491
  %712 = vmatprep.subr.bf16.mxu0 0
  %713 = vmatpush2.bf16.msra.mxu0 %v490
  %714 = vmatprep.mubr.bf16.mxu0 %v42
  %715 = vmatmul.mubr.bf16.gmra.mxu0 %v41
  %v716 = vpop.f32.mrf.mxu0
  %v717 = vadd.f32 %v677, %v716
  %v718 = vpop.f32.mrf.mxu0
  %v719 = vpop.f32.mrf.mxu0
  %v720 = vpop.f32.mrf.mxu0
  %721 = vdwg.mxu0
  %v722 = vmax.f32 %v717, 0.0
  %v723 = vpack.c.bf16 %v722, %v722
  %v724 = vld [vmem:[%s3] sm:$0xf]
  %v725 = vld [vmem:[%s3 + $0x4] sm:$0xf]
  %v726 = vld [vmem:[%s3 + $0x8] sm:$0xf]
  %v727 = vld [vmem:[%s3 + $0xc] sm:$0xf]
  %v728 = vld [vmem:[%s3 + $0x10] sm:$0xf]
  %v729 = vld [vmem:[%s3 + $0x14] sm:$0xf]
  %v730 = vld [vmem:[%s3 + $0x18] sm:$0xf]
  %v731 = vld [vmem:[%s3 + $0x1c] sm:$0xf]
  %v732 = vld [vmem:[%s3 + $0x20] sm:$0xf]
  %v733 = vld [vmem:[%s3 + $0x24] sm:$0xf]
  %v734 = vld [vmem:[%s3 + $0x28] sm:$0xf]
  %v735 = vld [vmem:[%s3 + $0x2c] sm:$0xf]
  %v736 = vld [vmem:[%s3 + $0x30] sm:$0xf]
  %v737 = vld [vmem:[%s3 + $0x34] sm:$0xf]
  %v738 = vld [vmem:[%s3 + $0x38] sm:$0xf]
  %v739 = vld [vmem:[%s3 + $0x3c] sm:$0xf]
  %v740 = vld [vmem:[%s4] sm:$0x1]
  %v742 = vlaneseq
  %v743 = vshrl.u32 %v742, 7
  %v744 = vsub.s32 0, %v743
  %v745 = vrot.slane %v740, %v744
  %v763 = vunpack.c.l.b16 %v724
  %v764 = vunpack.c.l.b16 %v725
  %v765 = vunpack.c.l.b16 %v726
  %v766 = vunpack.c.l.b16 %v727
  %v767 = vunpack.c.l.b16 %v728
  %v768 = vunpack.c.l.b16 %v729
  %v769 = vunpack.c.l.b16 %v730
  %v770 = vunpack.c.l.b16 %v731
  %v771 = vunpack.c.l.b16 %v732
  %v772 = vunpack.c.l.b16 %v733
  %v773 = vunpack.c.l.b16 %v734
  %v774 = vunpack.c.l.b16 %v735
  %v775 = vunpack.c.l.b16 %v736
  %v776 = vunpack.c.l.b16 %v737
  %v777 = vunpack.c.l.b16 %v738
  %v778 = vunpack.c.l.b16 %v739
  %v779 = vpack.c.b16 %v764, %v763
  %v780 = vpack.c.b16 %v766, %v765
  %v781 = vpack.c.b16 %v768, %v767
  %v782 = vpack.c.b16 %v770, %v769
  %v783 = vpack.c.b16 %v772, %v771
  %v784 = vpack.c.b16 %v774, %v773
  %v785 = vpack.c.b16 %v776, %v775
  %v786 = vpack.c.b16 %v778, %v777
  %795 = vmatprep.subr.bf16.mxu0 0
  %796 = vmatpush1.bf16.msra.mxu0 %v786
  %797 = vmatprep.subr.bf16.mxu0 0
  %798 = vmatpush1.bf16.msra.mxu0 %v785
  %799 = vmatprep.subr.bf16.mxu0 0
  %800 = vmatpush1.bf16.msra.mxu0 %v784
  %801 = vmatprep.subr.bf16.mxu0 0
  %802 = vmatpush1.bf16.msra.mxu0 %v783
  %803 = vmatprep.subr.bf16.mxu0 0
  %804 = vmatpush1.bf16.msra.mxu0 %v782
  %805 = vmatprep.subr.bf16.mxu0 0
  %806 = vmatpush1.bf16.msra.mxu0 %v781
  %807 = vmatprep.subr.bf16.mxu0 0
  %808 = vmatpush1.bf16.msra.mxu0 %v780
  %809 = vmatprep.subr.bf16.mxu0 0
  %810 = vmatpush1.bf16.msra.mxu0 %v779
  %811 = vmatprep.subr.bf16.mxu0 0
  %812 = vmatpush2.bf16.msra.mxu0 0
  %813 = vmatprep.subr.bf16.mxu0 0
  %814 = vmatpush2.bf16.msra.mxu0 0
  %815 = vmatprep.subr.bf16.mxu0 0
  %816 = vmatpush2.bf16.msra.mxu0 0
  %817 = vmatprep.subr.bf16.mxu0 0
  %818 = vmatpush2.bf16.msra.mxu0 0
  %819 = vmatprep.subr.bf16.mxu0 0
  %820 = vmatpush2.bf16.msra.mxu0 0
  %821 = vmatprep.subr.bf16.mxu0 0
  %822 = vmatpush2.bf16.msra.mxu0 0
  %823 = vmatprep.subr.bf16.mxu0 0
  %824 = vmatpush2.bf16.msra.mxu0 0
  %825 = vmatprep.subr.bf16.mxu0 0
  %826 = vmatpush2.bf16.msra.mxu0 0
  %827 = vmatprep.mubr.bf16.mxu0 0
  %828 = vmatmul.mubr.bf16.gmra.mxu0 %v723
  %v829 = vpop.f32.mrf.mxu0
  %v830 = vadd.f32 %v745, %v829
  %v831 = vpop.f32.mrf.mxu0
  %v832 = vpop.f32.mrf.mxu0
  %v833 = vpop.f32.mrf.mxu0
  %834 = vdwg.mxu0
  %v835 = vmax.f32 %v830, 0.0
  %v836 = vpack.c.bf16 %v835, %v835
  %v837 = vld [vmem:[%s5] sm:$0xf]
  %v838 = vld [vmem:[%s5 + $0x4] sm:$0xf]
  %v839 = vld [vmem:[%s5 + $0x8] sm:$0xf]
  %v840 = vld [vmem:[%s5 + $0xc] sm:$0xf]
  %v841 = vld [vmem:[%s5 + $0x10] sm:$0xf]
  %v842 = vld [vmem:[%s5 + $0x14] sm:$0xf]
  %v843 = vld [vmem:[%s5 + $0x18] sm:$0xf]
  %v844 = vld [vmem:[%s5 + $0x1c] sm:$0xf]
  %v845 = vld [vmem:[%s5 + $0x20] sm:$0xf]
  %v846 = vld [vmem:[%s5 + $0x24] sm:$0xf]
  %v847 = vld [vmem:[%s5 + $0x28] sm:$0xf]
  %v848 = vld [vmem:[%s5 + $0x2c] sm:$0xf]
  %v849 = vld [vmem:[%s5 + $0x30] sm:$0xf]
  %v850 = vld [vmem:[%s5 + $0x34] sm:$0xf]
  %v851 = vld [vmem:[%s5 + $0x38] sm:$0xf]
  %v852 = vld [vmem:[%s5 + $0x3c] sm:$0xf]
  %v853 = vld [vmem:[%s6] sm:$0x1]
  %v855 = vlaneseq
  %v856 = vshrl.u32 %v855, 7
  %v857 = vsub.s32 0, %v856
  %v858 = vrot.slane %v853, %v857
  %v876 = vunpack.c.l.b16 %v837
  %v877 = vunpack.c.l.b16 %v838
  %v878 = vunpack.c.l.b16 %v839
  %v879 = vunpack.c.l.b16 %v840
  %v880 = vunpack.c.l.b16 %v841
  %v881 = vunpack.c.l.b16 %v842
  %v882 = vunpack.c.l.b16 %v843
  %v883 = vunpack.c.l.b16 %v844
  %v884 = vunpack.c.l.b16 %v845
  %v885 = vunpack.c.l.b16 %v846
  %v886 = vunpack.c.l.b16 %v847
  %v887 = vunpack.c.l.b16 %v848
  %v888 = vunpack.c.l.b16 %v849
  %v889 = vunpack.c.l.b16 %v850
  %v890 = vunpack.c.l.b16 %v851
  %v891 = vunpack.c.l.b16 %v852
  %v892 = vpack.c.b16 %v877, %v876
  %v893 = vpack.c.b16 %v879, %v878
  %v894 = vpack.c.b16 %v881, %v880
  %v895 = vpack.c.b16 %v883, %v882
  %v896 = vpack.c.b16 %v885, %v884
  %v897 = vpack.c.b16 %v887, %v886
  %v898 = vpack.c.b16 %v889, %v888
  %v899 = vpack.c.b16 %v891, %v890
  %908 = vmatprep.subr.bf16.mxu0 0
  %909 = vmatpush1.bf16.msra.mxu0 %v899
  %910 = vmatprep.subr.bf16.mxu0 0
  %911 = vmatpush1.bf16.msra.mxu0 %v898
  %912 = vmatprep.subr.bf16.mxu0 0
  %913 = vmatpush1.bf16.msra.mxu0 %v897
  %914 = vmatprep.subr.bf16.mxu0 0
  %915 = vmatpush1.bf16.msra.mxu0 %v896
  %916 = vmatprep.subr.bf16.mxu0 0
  %917 = vmatpush1.bf16.msra.mxu0 %v895
  %918 = vmatprep.subr.bf16.mxu0 0
  %919 = vmatpush1.bf16.msra.mxu0 %v894
  %920 = vmatprep.subr.bf16.mxu0 0
  %921 = vmatpush1.bf16.msra.mxu0 %v893
  %922 = vmatprep.subr.bf16.mxu0 0
  %923 = vmatpush1.bf16.msra.mxu0 %v892
  %924 = vmatprep.subr.bf16.mxu0 0
  %925 = vmatpush2.bf16.msra.mxu0 0
  %926 = vmatprep.subr.bf16.mxu0 0
  %927 = vmatpush2.bf16.msra.mxu0 0
  %928 = vmatprep.subr.bf16.mxu0 0
  %929 = vmatpush2.bf16.msra.mxu0 0
  %930 = vmatprep.subr.bf16.mxu0 0
  %931 = vmatpush2.bf16.msra.mxu0 0
  %932 = vmatprep.subr.bf16.mxu0 0
  %933 = vmatpush2.bf16.msra.mxu0 0
  %934 = vmatprep.subr.bf16.mxu0 0
  %935 = vmatpush2.bf16.msra.mxu0 0
  %936 = vmatprep.subr.bf16.mxu0 0
  %937 = vmatpush2.bf16.msra.mxu0 0
  %938 = vmatprep.subr.bf16.mxu0 0
  %939 = vmatpush2.bf16.msra.mxu0 0
  %940 = vmatprep.mubr.bf16.mxu0 0
  %941 = vmatmul.mubr.bf16.gmra.mxu0 %v836
  %v942 = vpop.f32.mrf.mxu0
  %v943 = vadd.f32 %v858, %v942
  %v944 = vpop.f32.mrf.mxu0
  %v945 = vpop.f32.mrf.mxu0
  %v946 = vpop.f32.mrf.mxu0
  %947 = vdwg.mxu0
  %948 = vst [vmem:[%s7] sm:$0xff] %v943
  // Predicated region
  $region30: #{mlp_forward.1} parent=0 // pred_check
    _
  $region31: #{mlp_forward.1} parent=0 // pred_check_branch
    %950 = sbr.rel (0) target = $region33
  $region32: #{mlp_forward.1} parent=0 // pred_region
    _
  $region33: #{mlp_forward.1} parent=0 // pred_fallthru
    _
  // Predicated region
  $region34: #{mlp_forward.1} parent=0 // pred_check
    _
  $region35: #{mlp_forward.1} parent=0 // pred_check_branch
    %952 = sbr.rel (0) target = $region37
  $region36: #{mlp_forward.1} parent=0 // pred_region
    _
  $region37: #{mlp_forward.1} parent=0 // pred_fallthru
    _

</llo_original>
